<compile_context>
chip_gen: v7x
topology: tpu7x:2x2x1
jax: 0.10.0
libtpu: 0.0.40
codegen_flags: <defaults>
</compile_context>

<pallas_src>
import functools

import jax
import jax.numpy as jnp
from jax import lax
from jax.experimental import pallas as pl
from jax.experimental.pallas import tpu as pltpu

POWER_ITERATIONS = 1
EPS = 1e-12


def _round_up(x, m):
    return (x + m - 1) // m * m


# ---------------------------------------------------------------------------
# Power iteration -> 1/sigma + updated u, v   (plain jnp: tiny problem, a
# dedicated Pallas launch + HBM round-trips cost more than the math itself).
# ---------------------------------------------------------------------------
def spectral_normalize_stats(w2d, u, v, power_iterations=POWER_ITERATIONS):
    w2d = w2d.astype(jnp.float32)
    u = u.astype(jnp.float32)
    v = v.astype(jnp.float32)
    for _ in range(power_iterations):
        v = w2d.T @ u
        v = v / (jnp.linalg.norm(v) + EPS)   # matches l2normalize: x/(||x||+eps)
        u = w2d @ v
        u = u / (jnp.linalg.norm(u) + EPS)
    sigma = u @ (w2d @ v)
    inv_sigma = (1.0 / sigma).reshape(1)     # 1-D (1,) -> cheap SMEM scalar
    return inv_sigma, u, v


# ---------------------------------------------------------------------------
# Conv kernel: in-VMEM im2col + ONE (C_out, K) x (K, Mq_pad) MXU matmul
#   inv_sigma_ref: (1,) f32 SMEM scalar
#   x_ref:         (nb, C_in_pad, Lf)   flattened, spatially padded images
#   w_ref:         (C_out, K)           K = kh*kw*C_in_pad, ordered (tap, chan)
#   b_ref:         (C_out, 1) f32
#   o_ref:         (nb, C_out, Mq_pad)  lane-dense (Mq_pad % 128 == 0)
#   col_ref:       (K, Mq_pad) VMEM scratch (im2col buffer, fully rewritten
#                  every image -> no stale data even with "parallel" grid)
# Tap (ki, kj) contributes x_flat[:, q + ki*Wp + kj] to output position q.
# ---------------------------------------------------------------------------
def _conv_im2col_kernel(inv_sigma_ref, x_ref, w_ref, b_ref, o_ref, col_ref, *,
                        kh, kw, wp, mq_pad, nb):
    c_in_pad = x_ref.shape[1]
    inv_sigma = inv_sigma_ref[0]
    for n in range(nb):                      # static, small unrolled loop
        for t in range(kh * kw):             # static shifted slices
            ki, kj = t // kw, t % kw
            off = ki * wp + kj
            # full-sublane-tile row block (c_in_pad is a multiple of 8)
            col_ref[t * c_in_pad:(t + 1) * c_in_pad, :] = \
                x_ref[n, :, off:off + mq_pad]
        acc = jnp.dot(w_ref[...], col_ref[...],
                      preferred_element_type=jnp.float32)
        o_ref[n] = (acc * inv_sigma + b_ref[...]).astype(o_ref.dtype)


def _pick_batch_block(n, per_image_bytes, budget_bytes=4 << 20):
    """Largest divisor of n that keeps >=2 grid steps (v7x: 2 TCs) and fits a
    conservative per-step VMEM budget (sized for v7x's 64 MiB physical)."""
    best = 1
    for d in range(1, n + 1):
        if n % d:
            continue
        if d * per_image_bytes > budget_bytes:
            break
        if n == 1 or (n // d) >= 2:
            best = d
    return best


def conv2d_spectral(x, w_bar, bias, inv_sigma, *, compute_dtype=jnp.bfloat16):
    # x: (N, C_in, H, W) NCHW;  w_bar: (C_out, C_in, kh, kw); stride 1, 'same'.
    N, C_in, H, W = x.shape
    C_out, C_in2, kh, kw = w_bar.shape
    assert C_in2 == C_in
    # 'same' padding via k//2 is only valid for odd kernels, stride 1.
    assert kh % 2 == 1 and kw % 2 == 1, "only odd kernel sizes supported"
    ph, pw = kh // 2, kw // 2
    Hp, Wp = H + 2 * ph, W + 2 * pw
    c_in_pad = _round_up(C_in, 8)            # sublane-aligned tap blocks
    k_dim = kh * kw * c_in_pad               # merged contraction depth

    mq = H * Wp                              # padded-grid output positions
    mq_pad = _round_up(mq, 128)              # lane-dense output stores
    off_max = (kh - 1) * Wp + (kw - 1)
    # Flat-axis tap trick: the slice for output column q reads up to
    # q + off_max; columns q in [mq, mq_pad) and the wrap-around lanes at row
    # ends read zero-padded tail rows and are sliced off after the kernel.
    # One spatial pad must therefore already cover mq_pad + off_max elements.
    extra_h = -(-max(0, mq_pad + off_max - Hp * Wp) // Wp)
    hp_ext = Hp + extra_h
    l_flat = hp_ext * Wp
    assert mq_pad + off_max <= l_flat, "tap slices would read past padded tail"

    # ONE pad (+ cast) and ONE reshape; NCHW preserved, no transposes.
    xp = jnp.pad(x.astype(compute_dtype),
                 ((0, 0), (0, c_in_pad - C_in), (ph, ph + extra_h), (pw, pw)))
    x_flat = xp.reshape(N, c_in_pad, l_flat)

    # Weight as a single (C_out, K) matrix, K ordered (tap, channel) to match
    # the scratch row layout; padded channels get zero columns.
    w_k = jnp.transpose(w_bar, (0, 2, 3, 1))                 # (C_out, kh, kw, C_in)
    w_k = jnp.pad(w_k, ((0, 0), (0, 0), (0, 0), (0, c_in_pad - C_in)))
    w_k = w_k.reshape(C_out, k_dim).astype(compute_dtype)

    bias2d = bias.reshape(C_out, 1).astype(jnp.float32)
    inv_sigma = inv_sigma.reshape(1).astype(jnp.float32)

    itemsize = jnp.dtype(compute_dtype).itemsize
    out_itemsize = jnp.dtype(x.dtype).itemsize
    per_image_bytes = (c_in_pad * l_flat * itemsize
                       + C_out * mq_pad * out_itemsize)
    nb = _pick_batch_block(N, per_image_bytes)
    assert N % nb == 0
    grid = (N // nb,)

    kernel = functools.partial(_conv_im2col_kernel, kh=kh, kw=kw, wp=Wp,
                               mq_pad=mq_pad, nb=nb)

    cost = pl.CostEstimate(
        flops=int(2 * N * C_out * k_dim * mq_pad),
        transcendentals=0,
        bytes_accessed=int(N * c_in_pad * l_flat * itemsize
                           + C_out * k_dim * itemsize
                           + N * C_out * mq_pad * out_itemsize),
    )

    out_full = pl.pallas_call(
        kernel,
        out_shape=jax.ShapeDtypeStruct((N, C_out, mq_pad), x.dtype),
        grid=grid,
        in_specs=[
            pl.BlockSpec(memory_space=pltpu.MemorySpace.SMEM),          # 1/sigma
            pl.BlockSpec((nb, c_in_pad, l_flat), lambda i: (i, 0, 0)),  # x_flat
            pl.BlockSpec((C_out, k_dim), lambda i: (0, 0)),             # weight
            pl.BlockSpec((C_out, 1), lambda i: (0, 0)),                 # bias
        ],
        out_specs=pl.BlockSpec((nb, C_out, mq_pad), lambda i: (i, 0, 0)),
        scratch_shapes=[pltpu.VMEM((k_dim, mq_pad), compute_dtype)],    # im2col
        compiler_params=pltpu.CompilerParams(
            dimension_semantics=("parallel",)),
        cost_estimate=cost,
    )(inv_sigma, x_flat, w_k, bias2d)

    # Drop padded-grid columns; result is already NCHW (no transpose).
    out = out_full[:, :, :mq].reshape(N, C_out, H, Wp)[:, :, :, :W]
    return out


# ---------------------------------------------------------------------------
# SpectralNorm(Conv2d) forward:  _update_u_v() then module.forward(x)
# ---------------------------------------------------------------------------
def spectral_norm_conv_forward(x, w_bar, bias, u, v, *,
                               compute_dtype=jnp.bfloat16):
    height = w_bar.shape[0]
    width = w_bar.size // height
    w2d = w_bar.reshape(height, width)
    inv_sigma, u_new, v_new = spectral_normalize_stats(w2d, u, v)
    y = conv2d_spectral(x, w_bar, bias, inv_sigma, compute_dtype=compute_dtype)
    return y, u_new, v_new


if __name__ == "__main__":
    key = jax.random.PRNGKey(0)
    k1, k2, k3, k4, k5 = jax.random.split(key, 5)

    # small shapes consistent with wrapping nn.Conv2d(4, 8, 3, padding=1)
    N, C_in, H, W = 2, 4, 16, 16
    C_out, kh, kw = 8, 3, 3
    height, width = C_out, C_in * kh * kw

    x = jax.random.normal(k1, (N, C_in, H, W), jnp.float32)
    w_bar = 0.1 * jax.random.normal(k2, (C_out, C_in, kh, kw), jnp.float32)
    bias = 0.1 * jax.random.normal(k3, (C_out,), jnp.float32)
    u0 = jax.random.normal(k4, (height,), jnp.float32)
    v0 = jax.random.normal(k5, (width,), jnp.float32)
    u0 = u0 / (jnp.linalg.norm(u0) + EPS)     # l2normalize as in _make_params
    v0 = v0 / (jnp.linalg.norm(v0) + EPS)

    # pure-JAX reference for sanity
    def ref_forward(x, w_bar, bias, u, v):
        w2d = w_bar.reshape(height, width)
        for _ in range(POWER_ITERATIONS):
            v = w2d.T @ u
            v = v / (jnp.linalg.norm(v) + EPS)
            u = w2d @ v
            u = u / (jnp.linalg.norm(u) + EPS)
        sigma = u @ (w2d @ v)
        w_sn = (w2d / sigma).reshape(w_bar.shape)
        out = lax.conv_general_dilated(
            x, w_sn, window_strides=(1, 1),
            padding=((kh // 2, kh // 2), (kw // 2, kw // 2)),
            dimension_numbers=("NCHW", "OIHW", "NCHW"))
        return out + bias.reshape(1, C_out, 1, 1), u, v

    y_exp, u_exp, v_exp = ref_forward(x, w_bar, bias, u0, v0)

    # Production default: bf16 MXU feeds, f32 accumulation / sigma / bias.
    # (bf16 feed rounding is amplified by 1/sigma when sigma is small; at
    # these scales 5e-2 tolerance is comfortable.)
    y_bf16, u_new, v_new = spectral_norm_conv_forward(x, w_bar, bias, u0, v0)
    y_bf16 = jax.block_until_ready(y_bf16)
    assert jnp.allclose(y_bf16, y_exp, rtol=5e-2, atol=5e-2), float(
        jnp.max(jnp.abs(y_bf16 - y_exp)))
    assert jnp.allclose(u_new, u_exp, rtol=1e-5, atol=1e-5)
    assert jnp.allclose(v_new, v_exp, rtol=1e-5, atol=1e-5)

    # Debug path: f32 MXU feeds -> tight parity with the f32 reference.
    y_f32, _, _ = spectral_norm_conv_forward(
        x, w_bar, bias, u0, v0, compute_dtype=jnp.float32)
    y_f32 = jax.block_until_ready(y_f32)
    assert jnp.allclose(y_f32, y_exp, rtol=1e-4, atol=1e-4), float(
        jnp.max(jnp.abs(y_f32 - y_exp)))

    print("KERNEL_OK")
</pallas_src>

<mosaic_0001>
module attributes {stable_mosaic.version = 11 : i64} {
  func.func @_conv_im2col_kernel(%arg0: i32, %arg1: memref<1xf32, #tpu.memory_space<smem>>, %arg2: memref<1x8x432xbf16, #tpu.memory_space<vmem>>, %arg3: memref<8x72xbf16, #tpu.memory_space<vmem>>, %arg4: memref<8x1xf32, #tpu.memory_space<vmem>>, %arg5: memref<1x8x384xf32, #tpu.memory_space<vmem>>, %arg6: memref<72x384xbf16, #tpu.memory_space<vmem>>) attributes {dimension_semantics = [#tpu.dimension_semantics<parallel>], iteration_bounds = array<i64: 2>, scalar_prefetch = 0 : i64, scratch_operands = 1 : i64, tpu.core_type = #tpu.core_type<tc>, window_params = [{transform_indices = @transform_0, window_bounds = array<i64: 1>}, {transform_indices = @transform_1, window_bounds = array<i64: 1, 8, 432>}, {pipeline_mode = #tpu.pipeline_mode<synchronous>, transform_indices = @transform_2, window_bounds = array<i64: 8, 72>}, {pipeline_mode = #tpu.pipeline_mode<synchronous>, transform_indices = @transform_3, window_bounds = array<i64: 8, 1>}, {transform_indices = @transform_4, window_bounds = array<i64: 1, 8, 384>}]} {
    %c0 = arith.constant 0 : index
    %0 = memref.load %arg1[%c0] : memref<1xf32, #tpu.memory_space<smem>>
    %c0_0 = arith.constant 0 : index
    %c0_1 = arith.constant 0 : index
    %c0_2 = arith.constant 0 : index
    %1 = vector.load %arg2[%c0_0, %c0_1, %c0_2] : memref<1x8x432xbf16, #tpu.memory_space<vmem>>, vector<1x8x384xbf16>
    %2 = vector.shape_cast %1 : vector<1x8x384xbf16> to vector<8x384xbf16>
    %c0_3 = arith.constant 0 : index
    %c0_4 = arith.constant 0 : index
    %3 = vector.load %arg6[%c0_3, %c0_4] : memref<72x384xbf16, #tpu.memory_space<vmem>>, vector<8x384xbf16>
    tpu.vector_store %arg6[%c0_3, %c0_4], %2 {strides = array<i32>} : memref<72x384xbf16, #tpu.memory_space<vmem>>, vector<8x384xbf16>,
    %c0_5 = arith.constant 0 : index
    %c0_6 = arith.constant 0 : index
    %c1 = arith.constant 1 : index
    %4 = vector.load %arg2[%c0_5, %c0_6, %c1] : memref<1x8x432xbf16, #tpu.memory_space<vmem>>, vector<1x8x384xbf16>
    %5 = vector.shape_cast %4 : vector<1x8x384xbf16> to vector<8x384xbf16>
    %c8 = arith.constant 8 : index
    %c0_7 = arith.constant 0 : index
    %6 = vector.load %arg6[%c8, %c0_7] : memref<72x384xbf16, #tpu.memory_space<vmem>>, vector<8x384xbf16>
    tpu.vector_store %arg6[%c8, %c0_7], %5 {strides = array<i32>} : memref<72x384xbf16, #tpu.memory_space<vmem>>, vector<8x384xbf16>,
    %c0_8 = arith.constant 0 : index
    %c0_9 = arith.constant 0 : index
    %c2 = arith.constant 2 : index
    %7 = vector.load %arg2[%c0_8, %c0_9, %c2] : memref<1x8x432xbf16, #tpu.memory_space<vmem>>, vector<1x8x384xbf16>
    %8 = vector.shape_cast %7 : vector<1x8x384xbf16> to vector<8x384xbf16>
    %c16 = arith.constant 16 : index
    %c0_10 = arith.constant 0 : index
    %9 = vector.load %arg6[%c16, %c0_10] : memref<72x384xbf16, #tpu.memory_space<vmem>>, vector<8x384xbf16>
    tpu.vector_store %arg6[%c16, %c0_10], %8 {strides = array<i32>} : memref<72x384xbf16, #tpu.memory_space<vmem>>, vector<8x384xbf16>,
    %c0_11 = arith.constant 0 : index
    %c0_12 = arith.constant 0 : index
    %c18 = arith.constant 18 : index
    %10 = vector.load %arg2[%c0_11, %c0_12, %c18] : memref<1x8x432xbf16, #tpu.memory_space<vmem>>, vector<1x8x384xbf16>
    %11 = vector.shape_cast %10 : vector<1x8x384xbf16> to vector<8x384xbf16>
    %c24 = arith.constant 24 : index
    %c0_13 = arith.constant 0 : index
    %12 = vector.load %arg6[%c24, %c0_13] : memref<72x384xbf16, #tpu.memory_space<vmem>>, vector<8x384xbf16>
    tpu.vector_store %arg6[%c24, %c0_13], %11 {strides = array<i32>} : memref<72x384xbf16, #tpu.memory_space<vmem>>, vector<8x384xbf16>,
    %c0_14 = arith.constant 0 : index
    %c0_15 = arith.constant 0 : index
    %c19 = arith.constant 19 : index
    %13 = vector.load %arg2[%c0_14, %c0_15, %c19] : memref<1x8x432xbf16, #tpu.memory_space<vmem>>, vector<1x8x384xbf16>
    %14 = vector.shape_cast %13 : vector<1x8x384xbf16> to vector<8x384xbf16>
    %c32 = arith.constant 32 : index
    %c0_16 = arith.constant 0 : index
    %15 = vector.load %arg6[%c32, %c0_16] : memref<72x384xbf16, #tpu.memory_space<vmem>>, vector<8x384xbf16>
    tpu.vector_store %arg6[%c32, %c0_16], %14 {strides = array<i32>} : memref<72x384xbf16, #tpu.memory_space<vmem>>, vector<8x384xbf16>,
    %c0_17 = arith.constant 0 : index
    %c0_18 = arith.constant 0 : index
    %c20 = arith.constant 20 : index
    %16 = vector.load %arg2[%c0_17, %c0_18, %c20] : memref<1x8x432xbf16, #tpu.memory_space<vmem>>, vector<1x8x384xbf16>
    %17 = vector.shape_cast %16 : vector<1x8x384xbf16> to vector<8x384xbf16>
    %c40 = arith.constant 40 : index
    %c0_19 = arith.constant 0 : index
    %18 = vector.load %arg6[%c40, %c0_19] : memref<72x384xbf16, #tpu.memory_space<vmem>>, vector<8x384xbf16>
    tpu.vector_store %arg6[%c40, %c0_19], %17 {strides = array<i32>} : memref<72x384xbf16, #tpu.memory_space<vmem>>, vector<8x384xbf16>,
    %c0_20 = arith.constant 0 : index
    %c0_21 = arith.constant 0 : index
    %c36 = arith.constant 36 : index
    %19 = vector.load %arg2[%c0_20, %c0_21, %c36] : memref<1x8x432xbf16, #tpu.memory_space<vmem>>, vector<1x8x384xbf16>
    %20 = vector.shape_cast %19 : vector<1x8x384xbf16> to vector<8x384xbf16>
    %c48 = arith.constant 48 : index
    %c0_22 = arith.constant 0 : index
    %21 = vector.load %arg6[%c48, %c0_22] : memref<72x384xbf16, #tpu.memory_space<vmem>>, vector<8x384xbf16>
    tpu.vector_store %arg6[%c48, %c0_22], %20 {strides = array<i32>} : memref<72x384xbf16, #tpu.memory_space<vmem>>, vector<8x384xbf16>,
    %c0_23 = arith.constant 0 : index
    %c0_24 = arith.constant 0 : index
    %c37 = arith.constant 37 : index
    %22 = vector.load %arg2[%c0_23, %c0_24, %c37] : memref<1x8x432xbf16, #tpu.memory_space<vmem>>, vector<1x8x384xbf16>
    %23 = vector.shape_cast %22 : vector<1x8x384xbf16> to vector<8x384xbf16>
    %c56 = arith.constant 56 : index
    %c0_25 = arith.constant 0 : index
    %24 = vector.load %arg6[%c56, %c0_25] : memref<72x384xbf16, #tpu.memory_space<vmem>>, vector<8x384xbf16>
    tpu.vector_store %arg6[%c56, %c0_25], %23 {strides = array<i32>} : memref<72x384xbf16, #tpu.memory_space<vmem>>, vector<8x384xbf16>,
    %c0_26 = arith.constant 0 : index
    %c0_27 = arith.constant 0 : index
    %c38 = arith.constant 38 : index
    %25 = vector.load %arg2[%c0_26, %c0_27, %c38] : memref<1x8x432xbf16, #tpu.memory_space<vmem>>, vector<1x8x384xbf16>
    %26 = vector.shape_cast %25 : vector<1x8x384xbf16> to vector<8x384xbf16>
    %c64 = arith.constant 64 : index
    %c0_28 = arith.constant 0 : index
    %27 = vector.load %arg6[%c64, %c0_28] : memref<72x384xbf16, #tpu.memory_space<vmem>>, vector<8x384xbf16>
    tpu.vector_store %arg6[%c64, %c0_28], %26 {strides = array<i32>} : memref<72x384xbf16, #tpu.memory_space<vmem>>, vector<8x384xbf16>,
    %c0_29 = arith.constant 0 : index
    %c0_30 = arith.constant 0 : index
    %28 = vector.load %arg3[%c0_29, %c0_30] : memref<8x72xbf16, #tpu.memory_space<vmem>>, vector<8x72xbf16>
    %c0_31 = arith.constant 0 : index
    %c0_32 = arith.constant 0 : index
    %29 = vector.load %arg6[%c0_31, %c0_32] : memref<72x384xbf16, #tpu.memory_space<vmem>>, vector<72x384xbf16>
    %cst = arith.constant dense<0.000000e+00> : vector<8x384xf32>
    %30 = tpu.matmul %28, %29, %cst {dimension_numbers = #tpu.dot_dimension_numbers<[1], [0], [0], [1], [0, 0, 1, 1], [], []>} : vector<8x72xbf16>, vector<72x384xbf16>, vector<8x384xf32> -> vector<8x384xf32>
    %31 = vector.broadcast %0 : f32 to vector<8x384xf32>
    %32 = arith.mulf %30, %31 : vector<8x384xf32>
    %c0_33 = arith.constant 0 : index
    %c0_34 = arith.constant 0 : index
    %33 = vector.load %arg4[%c0_33, %c0_34] : memref<8x1xf32, #tpu.memory_space<vmem>>, vector<8x1xf32>
    %34 = vector.broadcast %33 : vector<8x1xf32> to vector<8x384xf32>
    %35 = arith.addf %32, %34 : vector<8x384xf32>
    %c0_35 = arith.constant 0 : index
    %c0_36 = arith.constant 0 : index
    %c0_37 = arith.constant 0 : index
    %36 = vector.load %arg5[%c0_35, %c0_36, %c0_37] : memref<1x8x384xf32, #tpu.memory_space<vmem>>, vector<1x8x384xf32>
    %37 = vector.shape_cast %36 : vector<1x8x384xf32> to vector<8x384xf32>
    %38 = vector.shape_cast %35 : vector<8x384xf32> to vector<1x8x384xf32>
    tpu.vector_store %arg5[%c0_35, %c0_36, %c0_37], %38 {strides = array<i32>} : memref<1x8x384xf32, #tpu.memory_space<vmem>>, vector<1x8x384xf32>,
    return
  }
  func.func @transform_0(%arg0: i32) -> i32 {
    %c0_i32 = arith.constant 0 : i32
    %c0_i32_0 = arith.constant 0 : i32
    return %c0_i32 : i32
  }
  func.func @transform_1(%arg0: i32) -> (i32, i32, i32) {
    %c0_i32 = arith.constant 0 : i32
    %c0_i32_0 = arith.constant 0 : i32
    %c0_i32_1 = arith.constant 0 : i32
    return %arg0, %c0_i32, %c0_i32_0 : i32, i32, i32
  }
  func.func @transform_2(%arg0: i32) -> (i32, i32) {
    %c0_i32 = arith.constant 0 : i32
    %c0_i32_0 = arith.constant 0 : i32
    %c0_i32_1 = arith.constant 0 : i32
    return %c0_i32, %c0_i32_0 : i32, i32
  }
  func.func @transform_3(%arg0: i32) -> (i32, i32) {
    %c0_i32 = arith.constant 0 : i32
    %c0_i32_0 = arith.constant 0 : i32
    %c0_i32_1 = arith.constant 0 : i32
    return %c0_i32, %c0_i32_0 : i32, i32
  }
  func.func @transform_4(%arg0: i32) -> (i32, i32, i32) {
    %c0_i32 = arith.constant 0 : i32
    %c0_i32_0 = arith.constant 0 : i32
    %c0_i32_1 = arith.constant 0 : i32
    return %arg0, %c0_i32, %c0_i32_0 : i32, i32, i32
  }
}

</mosaic_0001>

<llo_original>
// kernel: tpu_custom_call.1
$region0: #{tpu_custom_call.1}
  #allocation0 [shape = 'u32[]', space=smem, size = 0x4, offset = 0x4, fixed_abs, tag = 'smem constant byte address 0x4 - core index']
  #allocation1 [shape = 'u32[144,128]{1,0:T(1,128)}', space=vmem, size = 0x12000, scoped, tag = 'internal scratch']
  #allocation2 [shape = 'bf16[72,384]{1,0:T(8,128)(2,1)}', space=vmem, size = 0xd800, scoped, tag = 'scratch operand']
  #allocation3 [shape = 'f32[1]{0:T(128)S(6)}', space=smem, size = 0x200, scoped, tag = 'scoped memory for tpu_custom_call.1']
  %s0 = inlined_call_operand.<no memory space> [shape: f32[1], index: 0, kind: input, shape index: {}]
  %s1 = inlined_call_operand.hbm [shape: bf16[2,8,432], index: 1, kind: input, shape index: {}]
  %s2 = inlined_call_operand.vmem [shape: bf16[8,72], index: 2, kind: input, shape index: {}]
  %s3 = inlined_call_operand.vmem [shape: f32[8,1], index: 3, kind: input, shape index: {}]
  %s4 = inlined_call_operand.hbm [shape: f32[2,8,384], index: 4, kind: output, shape index: {}]
  %s5 = sld [smem:[#allocation0]]
  $region53: #{tpu_custom_call.1} parent=0
    _
  %s7 = ssub.s32 1, %s5
  %s8 = scalar_select 0, %s7, %s5
  %9 = sst [smem:[#allocation3]] %s0
  $region1: #{tpu_custom_call.1} parent=0
    #allocation4 [shape = 'u8[16384]{0}', space=vmem, size = 0x4000, scoped, tag = 'input window, operand 1']
    #allocation5 [shape = 's32[2]{0}', space=sflag, size = 0x8, scoped, tag = 'scoped memory for tpu_custom_call.1']
    #allocation6 [shape = 's32[2]{0}', space=sflag, size = 0x8, scoped, tag = 'scoped memory for tpu_custom_call.1']
    #allocation7 [shape = 'u8[24576]{0}', space=vmem, size = 0x6000, scoped, tag = 'output window, operand 0']
    %10 = vsyncpa [#allocation5], 0
    %s11 = scalar_lea.sflag [#allocation5], 1
    %12 = vsyncpa %s11, 0
    %13 = vsyncpa [#allocation6], 0
    %s14 = scalar_lea.sflag [#allocation6], 1
    %15 = vsyncpa %s14, 0
    loop: start=0, step=1, limit=4
    $region2: #{tpu_custom_call.1} parent=1 // loop_pre_header
      _
    $region3: #{tpu_custom_call.1} parent=1 // loop_header
      %s17 = sphi 0, %s21
      %p18 = scmp.ge.s32.totalorder %s17, 4
      %s25 = sphi 0, %s25
      %s27 = sphi 0, %s25
      %s28 = sphi 0, %s27
      %s42 = sphi 0, %s28
      %s48 = sphi 0, %s50
      %s51 = sphi 0, %s48
      %s52 = sphi 0, %s51
      %s68 = sphi 0, %s52
      %s72 = sphi 0, %s72
      %s74 = sphi 0, %s72
      %s75 = sphi 0, %s74
      %s89 = sphi 0, %s75
      %s93 = sphi 0, %s93
      %s95 = sphi 0, %s93
      %s96 = sphi 0, %s95
      %s110 = sphi 0, %s96
      %s116 = sphi 0, %s118
      %s119 = sphi 0, %s116
      %s120 = sphi 0, %s119
      %s136 = sphi 0, %s120
    $region4: #{tpu_custom_call.1} parent=1 // loop_header_branch
      %20 = sbr.rel (%p18) target = $region8
    $region5: #{tpu_custom_call.1} parent=1 // loop_body
      %s22 = ssub.s32 %s17, 1
      %s23 = ssub.s32 %s17, 2
      %s24 = sadd.s32 %s17, 1
      %s26 = sadd.s32 %s25, 1
      %p29 = scmp.eq.s32.totalorder %s17, 1
      %p30 = scmp.ne.s32.totalorder %s25, %s27
      %p31 = scmp.eq.s32.totalorder %s17, 0
      %p32 = por %p30, %p31
      %p33 = scmp.ne.s32.totalorder %s25, %s27
      %p34 = scmp.eq.s32.totalorder %s22, 1
      %p35 = por %p33, %p34
      %p36 = scmp.ne.s32.totalorder %s27, %s28
      %p37 = scmp.eq.s32.totalorder %s22, 0
      %p38 = por %p36, %p37
      %p39 = scmp.ne.s32.totalorder %s27, %s28
      %p40 = scmp.eq.s32.totalorder %s23, 1
      %p41 = por %p39, %p40
      %p43 = scmp.ne.s32.totalorder %s28, %s42
      %p44 = scmp.eq.s32.totalorder %s23, 0
      %p45 = por %p43, %p44
      %s46 = ssub.s32 %s17, %s24
      %p47 = scmp.eq.s32.totalorder %s46, 0
      %s49 = sadd.s32 %s48, 1
      %s50 = scalar_select %p47, %s48, %s49
      %p53 = pneg %p47
      %p54 = scmp.eq.s32.totalorder %s17, 1
      %p55 = por %p53, %p54
      %p56 = scmp.ne.s32.totalorder %s48, %s51
      %p57 = scmp.eq.s32.totalorder %s17, 0
      %p58 = por %p56, %p57
      %p59 = scmp.ne.s32.totalorder %s48, %s51
      %p60 = scmp.eq.s32.totalorder %s22, 1
      %p61 = por %p59, %p60
      %p62 = scmp.ne.s32.totalorder %s51, %s52
      %p63 = scmp.eq.s32.totalorder %s22, 0
      %p64 = por %p62, %p63
      %p65 = scmp.ne.s32.totalorder %s51, %s52
      %p66 = scmp.eq.s32.totalorder %s23, 1
      %p67 = por %p65, %p66
      %p69 = scmp.ne.s32.totalorder %s52, %s68
      %p70 = scmp.eq.s32.totalorder %s23, 0
      %p71 = por %p69, %p70
      %s73 = sadd.s32 %s72, 1
      %p76 = scmp.eq.s32.totalorder %s17, 1
      %p77 = scmp.ne.s32.totalorder %s72, %s74
      %p78 = scmp.eq.s32.totalorder %s17, 0
      %p79 = por %p77, %p78
      %p80 = scmp.ne.s32.totalorder %s72, %s74
      %p81 = scmp.eq.s32.totalorder %s22, 1
      %p82 = por %p80, %p81
      %p83 = scmp.ne.s32.totalorder %s74, %s75
      %p84 = scmp.eq.s32.totalorder %s22, 0
      %p85 = por %p83, %p84
      %p86 = scmp.ne.s32.totalorder %s74, %s75
      %p87 = scmp.eq.s32.totalorder %s23, 1
      %p88 = por %p86, %p87
      %p90 = scmp.ne.s32.totalorder %s75, %s89
      %p91 = scmp.eq.s32.totalorder %s23, 0
      %p92 = por %p90, %p91
      %s94 = sadd.s32 %s93, 1
      %p97 = scmp.eq.s32.totalorder %s17, 1
      %p98 = scmp.ne.s32.totalorder %s93, %s95
      %p99 = scmp.eq.s32.totalorder %s17, 0
      %p100 = por %p98, %p99
      %p101 = scmp.ne.s32.totalorder %s93, %s95
      %p102 = scmp.eq.s32.totalorder %s22, 1
      %p103 = por %p101, %p102
      %p104 = scmp.ne.s32.totalorder %s95, %s96
      %p105 = scmp.eq.s32.totalorder %s22, 0
      %p106 = por %p104, %p105
      %p107 = scmp.ne.s32.totalorder %s95, %s96
      %p108 = scmp.eq.s32.totalorder %s23, 1
      %p109 = por %p107, %p108
      %p111 = scmp.ne.s32.totalorder %s96, %s110
      %p112 = scmp.eq.s32.totalorder %s23, 0
      %p113 = por %p111, %p112
      %s114 = ssub.s32 %s17, %s24
      %p115 = scmp.eq.s32.totalorder %s114, 0
      %s117 = sadd.s32 %s116, 1
      %s118 = scalar_select %p115, %s116, %s117
      %p121 = pneg %p115
      %p122 = scmp.eq.s32.totalorder %s17, 1
      %p123 = por %p121, %p122
      %p124 = scmp.ne.s32.totalorder %s116, %s119
      %p125 = scmp.eq.s32.totalorder %s17, 0
      %p126 = por %p124, %p125
      %p127 = scmp.ne.s32.totalorder %s116, %s119
      %p128 = scmp.eq.s32.totalorder %s22, 1
      %p129 = por %p127, %p128
      %p130 = scmp.ne.s32.totalorder %s119, %s120
      %p131 = scmp.eq.s32.totalorder %s22, 0
      %p132 = por %p130, %p131
      %p133 = scmp.ne.s32.totalorder %s119, %s120
      %p134 = scmp.eq.s32.totalorder %s23, 1
      %p135 = por %p133, %p134
      %p137 = scmp.ne.s32.totalorder %s120, %s136
      %p138 = scmp.eq.s32.totalorder %s23, 0
      %p139 = por %p137, %p138
      %p140 = scmp.le.s32.totalorder 1, %s17
      %p141 = scmp.lt.s32.totalorder %s17, 3
      %p142 = pnand %p140, %p141
      %p143 = pneg %p142
      // Predicated region
      $region9: #{tpu_custom_call.1} parent=5 // pred_check
        _
      $region10: #{tpu_custom_call.1} parent=5 // pred_check_branch
        %145 = sbr.rel (%p142) target = $region12
      $region11: #{tpu_custom_call.1} parent=5 // pred_region
        %s146 = ssub.s32 %s17, 1
        // Predicated region
        $region13: #{tpu_custom_call.1} parent=11 // pred_check
          %p147 = pneg %p38
        $region14: #{tpu_custom_call.1} parent=11 // pred_check_branch
          %149 = sbr.rel (%p147) target = $region16
        $region15: #{tpu_custom_call.1} parent=11 // pred_region
          _
        $region16: #{tpu_custom_call.1} parent=11 // pred_fallthru
          _
        // Predicated region
        $region17: #{tpu_custom_call.1} parent=11 // pred_check
          %p150 = pneg %p85
        $region18: #{tpu_custom_call.1} parent=11 // pred_check_branch
          %152 = sbr.rel (%p150) target = $region20
        $region19: #{tpu_custom_call.1} parent=11 // pred_region
          _
        $region20: #{tpu_custom_call.1} parent=11 // pred_fallthru
          _
        // Predicated region
        $region21: #{tpu_custom_call.1} parent=11 // pred_check
          %p153 = pneg %p106
        $region22: #{tpu_custom_call.1} parent=11 // pred_check_branch
          %155 = sbr.rel (%p153) target = $region24
        $region23: #{tpu_custom_call.1} parent=11 // pred_region
          _
        $region24: #{tpu_custom_call.1} parent=11 // pred_fallthru
          _
      $region12: #{tpu_custom_call.1} parent=5 // pred_fallthru
        _
      %p156 = scmp.lt.s32.totalorder %s17, 2
      // Predicated region
      $region25: #{tpu_custom_call.1} parent=5 // pred_check
        %p157 = pneg %p156
      $region26: #{tpu_custom_call.1} parent=5 // pred_check_branch
        %159 = sbr.rel (%p157) target = $region28
      $region27: #{tpu_custom_call.1} parent=5 // pred_region
        // Predicated region
        $region29: #{tpu_custom_call.1} parent=27 // pred_check
          %p160 = pneg %p58
        $region30: #{tpu_custom_call.1} parent=27 // pred_check_branch
          %162 = sbr.rel (%p160) target = $region32
        $region31: #{tpu_custom_call.1} parent=27 // pred_region
          %s163 = sand.u32 %s48, 1
          %s164 = scalar_lea.sflag [#allocation5], %s163
          %s165 = sand.u32 %s48, 1
          %s166 = smul.addr %s165, 16
          %s167 = scalar_lea.vmem [#allocation4], %s166
          %s169 = ssub.s32 256, 256
          %170 = vsyncadd %s164, %s169
          %s171 = smul.addr %s17, 4
          %s172 = smul.addr %s171, 64
          %s173 = scalar_lea.hbm %s1, %s172
          %s175 = sshll.u32 %s167, 4
          %s176 = int_to_ptr.vmem [resolvable:$true] %s175
          %178 = dma.hbm_to_vmem [thread:$0]  %s173, 256, %s176, %s164
        $region32: #{tpu_custom_call.1} parent=27 // pred_fallthru
          _
      $region28: #{tpu_custom_call.1} parent=5 // pred_fallthru
        _
      %p179 = scmp.le.s32.totalorder 1, %s17
      %p180 = scmp.lt.s32.totalorder %s17, 3
      %p181 = pnand %p179, %p180
      %p182 = pneg %p181
      // Predicated region
      $region33: #{tpu_custom_call.1} parent=5 // pred_check
        _
      $region34: #{tpu_custom_call.1} parent=5 // pred_check_branch
        %184 = sbr.rel (%p181) target = $region36
      $region35: #{tpu_custom_call.1} parent=5 // pred_region
        %s185 = ssub.s32 %s17, 1
        %s186 = sand.u32 %s51, 1
        %s187 = scalar_lea.sflag [#allocation5], %s186
        %s188 = sand.u32 %s51, 1
        %s189 = smul.addr %s188, 16
        %s190 = scalar_lea.vmem [#allocation4], %s189
        // Predicated region
        $region37: #{tpu_custom_call.1} parent=35 // pred_check
          %p191 = pneg %p64
        $region38: #{tpu_custom_call.1} parent=35 // pred_check_branch
          %193 = sbr.rel (%p191) target = $region40
        $region39: #{tpu_custom_call.1} parent=35 // pred_region
          %194 = dma.done %s187, 256
        $region40: #{tpu_custom_call.1} parent=35 // pred_fallthru
          _
        %p195 = pneg %p38
        %p196 = pneg %p35
        %s197 = sand.u32 %s51, 1
        %s198 = scalar_lea.sflag [#allocation5], %s197
        %s199 = sand.u32 %s51, 1
        %s200 = smul.addr %s199, 16
        %s201 = scalar_lea.vmem [#allocation4], %s200
        %p202 = pneg %p64
        %p203 = pneg %p61
        %p204 = pneg %p85
        %p205 = pneg %p82
        %p206 = pneg %p106
        %p207 = pneg %p103
        %p208 = pneg %p132
        %p209 = pneg %p129
        %s210 = sand.u32 %s119, 1
        %s211 = scalar_lea.sflag [#allocation6], %s210
        %s212 = sand.u32 %s119, 1
        %s213 = smul.addr %s212, 24
        %s214 = scalar_lea.vmem [#allocation7], %s213
        %s216 = sld [smem:[#allocation3]]
        %v217 = vld [vmem:[%s190] sm:$0xff]
        %v218 = vld [vmem:[%s190 + $0x8] sm:$0xf]
        %219 = vst [vmem:[#allocation2] sm:$0xff] %v217
        %220 = vst [vmem:[#allocation2 + $0x8] sm:$0xf] %v218
        %v221 = vld [vmem:[%s190] sm:$0xff]
        %v222 = vld [vmem:[%s190 + $0x8] sm:$0xff]
        %225 = vrot.lane.b32.xlu0 %v221, 127
        %v226 = vpop.permute.xlu0 %225
        %227 = vrot.lane.b32.xlu0 %v222, 127
        %v228 = vpop.permute.xlu0 %227
        %v229 = vrot.slane %v226, 4
        %v230 = vrot.slane %v228, 4
        %vm231 = vcmask 1043456
        %v232 = vsel %vm231, %v229, %v230
        %vm233 = vcmask 1039360
        %v234 = vsel %vm233, %v226, %v232
        %v235 = vsel %vm233, %v228, %v230
        %238 = vst [vmem:[#allocation2 + $0xc] sm:$0xff] %v234
        %239 = vst [vmem:[#allocation2 + $0x14] sm:$0xf] %v235
        %v240 = vld [vmem:[%s190] sm:$0xff]
        %v241 = vld [vmem:[%s190 + $0x8] sm:$0xff]
        %244 = vrot.lane.b32.xlu0 %v240, 126
        %v245 = vpop.permute.xlu0 %244
        %246 = vrot.lane.b32.xlu0 %v241, 126
        %v247 = vpop.permute.xlu0 %246
        %v248 = vrot.slane %v245, 4
        %v249 = vrot.slane %v247, 4
        %v250 = vsel %vm231, %v248, %v249
        %vm251 = vcmask 1031168
        %v252 = vsel %vm251, %v245, %v250
        %v253 = vsel %vm251, %v247, %v249
        %256 = vst [vmem:[#allocation2 + $0x18] sm:$0xff] %v252
        %257 = vst [vmem:[#allocation2 + $0x20] sm:$0xf] %v253
        %v258 = vld [vmem:[%s190] sm:$0xff]
        %v259 = vld [vmem:[%s190 + $0x8] sm:$0xff]
        %262 = vrot.lane.b32.xlu0 %v258, 110
        %v263 = vpop.permute.xlu0 %262
        %264 = vrot.lane.b32.xlu0 %v259, 110
        %v265 = vpop.permute.xlu0 %264
        %v266 = vrot.slane %v263, 4
        %v267 = vrot.slane %v265, 4
        %v268 = vsel %vm231, %v266, %v267
        %vm269 = vcmask 900096
        %v270 = vsel %vm269, %v263, %v268
        %v271 = vsel %vm269, %v265, %v267
        %274 = vst [vmem:[#allocation2 + $0x24] sm:$0xff] %v270
        %275 = vst [vmem:[#allocation2 + $0x2c] sm:$0xf] %v271
        %v276 = vld [vmem:[%s190] sm:$0xff]
        %v277 = vld [vmem:[%s190 + $0x8] sm:$0xff]
        %280 = vrot.lane.b32.xlu0 %v276, 109
        %v281 = vpop.permute.xlu0 %280
        %282 = vrot.lane.b32.xlu0 %v277, 109
        %v283 = vpop.permute.xlu0 %282
        %v284 = vrot.slane %v281, 4
        %v285 = vrot.slane %v283, 4
        %v286 = vsel %vm231, %v284, %v285
        %vm287 = vcmask 891904
        %v288 = vsel %vm287, %v281, %v286
        %v289 = vsel %vm287, %v283, %v285
        %292 = vst [vmem:[#allocation2 + $0x30] sm:$0xff] %v288
        %293 = vst [vmem:[#allocation2 + $0x38] sm:$0xf] %v289
        %v294 = vld [vmem:[%s190] sm:$0xff]
        %v295 = vld [vmem:[%s190 + $0x8] sm:$0xff]
        %298 = vrot.lane.b32.xlu0 %v294, 108
        %v299 = vpop.permute.xlu0 %298
        %300 = vrot.lane.b32.xlu0 %v295, 108
        %v301 = vpop.permute.xlu0 %300
        %v302 = vrot.slane %v299, 4
        %v303 = vrot.slane %v301, 4
        %v304 = vsel %vm231, %v302, %v303
        %vm305 = vcmask 883712
        %v306 = vsel %vm305, %v299, %v304
        %v307 = vsel %vm305, %v301, %v303
        %310 = vst [vmem:[#allocation2 + $0x3c] sm:$0xff] %v306
        %311 = vst [vmem:[#allocation2 + $0x44] sm:$0xf] %v307
        %v312 = vld [vmem:[%s190] sm:$0xff]
        %v313 = vld [vmem:[%s190 + $0x8] sm:$0xff]
        %316 = vrot.lane.b32.xlu0 %v312, 92
        %v317 = vpop.permute.xlu0 %316
        %318 = vrot.lane.b32.xlu0 %v313, 92
        %v319 = vpop.permute.xlu0 %318
        %v320 = vrot.slane %v317, 4
        %v321 = vrot.slane %v319, 4
        %v322 = vsel %vm231, %v320, %v321
        %vm323 = vcmask 752640
        %v324 = vsel %vm323, %v317, %v322
        %v325 = vsel %vm323, %v319, %v321
        %328 = vst [vmem:[#allocation2 + $0x48] sm:$0xff] %v324
        %329 = vst [vmem:[#allocation2 + $0x50] sm:$0xf] %v325
        %v330 = vld [vmem:[%s190] sm:$0xff]
        %v331 = vld [vmem:[%s190 + $0x8] sm:$0xff]
        %334 = vrot.lane.b32.xlu0 %v330, 91
        %v335 = vpop.permute.xlu0 %334
        %336 = vrot.lane.b32.xlu0 %v331, 91
        %v337 = vpop.permute.xlu0 %336
        %v338 = vrot.slane %v335, 4
        %v339 = vrot.slane %v337, 4
        %v340 = vsel %vm231, %v338, %v339
        %vm341 = vcmask 744448
        %v342 = vsel %vm341, %v335, %v340
        %v343 = vsel %vm341, %v337, %v339
        %346 = vst [vmem:[#allocation2 + $0x54] sm:$0xff] %v342
        %347 = vst [vmem:[#allocation2 + $0x5c] sm:$0xf] %v343
        %v348 = vld [vmem:[%s190] sm:$0xff]
        %v349 = vld [vmem:[%s190 + $0x8] sm:$0xff]
        %352 = vrot.lane.b32.xlu0 %v348, 90
        %v353 = vpop.permute.xlu0 %352
        %354 = vrot.lane.b32.xlu0 %v349, 90
        %v355 = vpop.permute.xlu0 %354
        %v356 = vrot.slane %v353, 4
        %v357 = vrot.slane %v355, 4
        %v358 = vsel %vm231, %v356, %v357
        %vm359 = vcmask 736256
        %v360 = vsel %vm359, %v353, %v358
        %v361 = vsel %vm359, %v355, %v357
        %364 = vst [vmem:[#allocation2 + $0x60] sm:$0xff] %v360
        %365 = vst [vmem:[#allocation2 + $0x68] sm:$0xf] %v361
        %v366 = vld [vmem:[%s2] sm:$0xf]
        %v367 = vld [vmem:[#allocation2] sm:$0xff]
        %v368 = vld [vmem:[#allocation2 + $0x8] sm:$0xf]
        %v369 = vld [vmem:[#allocation2 + $0xc] sm:$0xff]
        %v370 = vld [vmem:[#allocation2 + $0x14] sm:$0xf]
        %v371 = vld [vmem:[#allocation2 + $0x18] sm:$0xff]
        %v372 = vld [vmem:[#allocation2 + $0x20] sm:$0xf]
        %v373 = vld [vmem:[#allocation2 + $0x24] sm:$0xff]
        %v374 = vld [vmem:[#allocation2 + $0x2c] sm:$0xf]
        %v375 = vld [vmem:[#allocation2 + $0x30] sm:$0xff]
        %v376 = vld [vmem:[#allocation2 + $0x38] sm:$0xf]
        %v377 = vld [vmem:[#allocation2 + $0x3c] sm:$0xff]
        %v378 = vld [vmem:[#allocation2 + $0x44] sm:$0xf]
        %v379 = vld [vmem:[#allocation2 + $0x48] sm:$0xff]
        %v380 = vld [vmem:[#allocation2 + $0x50] sm:$0xf]
        %v381 = vld [vmem:[#allocation2 + $0x54] sm:$0xff]
        %v382 = vld [vmem:[#allocation2 + $0x5c] sm:$0xf]
        %v383 = vld [vmem:[#allocation2 + $0x60] sm:$0xff]
        %v384 = vld [vmem:[#allocation2 + $0x68] sm:$0xf]
        %v403 = vunpack.c.l.b16 %v367
        %v404 = vunpack.c.h.b16 %v367
        %v405 = vunpack.c.l.b16 %v368
        %v406 = vunpack.c.l.b16 %v369
        %v407 = vunpack.c.h.b16 %v369
        %v408 = vunpack.c.l.b16 %v370
        %v409 = vunpack.c.l.b16 %v371
        %v410 = vunpack.c.h.b16 %v371
        %v411 = vunpack.c.l.b16 %v372
        %v412 = vunpack.c.l.b16 %v373
        %v413 = vunpack.c.h.b16 %v373
        %v414 = vunpack.c.l.b16 %v374
        %v415 = vunpack.c.l.b16 %v375
        %v416 = vunpack.c.h.b16 %v375
        %v417 = vunpack.c.l.b16 %v376
        %v418 = vunpack.c.l.b16 %v377
        %v419 = vunpack.c.h.b16 %v377
        %v420 = vunpack.c.l.b16 %v378
        %v421 = vunpack.c.l.b16 %v379
        %v422 = vunpack.c.h.b16 %v379
        %v423 = vunpack.c.l.b16 %v380
        %v424 = vunpack.c.l.b16 %v381
        %v425 = vunpack.c.h.b16 %v381
        %v426 = vunpack.c.l.b16 %v382
        %v427 = vunpack.c.l.b16 %v383
        %v428 = vunpack.c.h.b16 %v383
        %v429 = vunpack.c.l.b16 %v384
        %v430 = vpack.c.b16 %v406, %v403
        %v431 = vpack.c.b16 %v407, %v404
        %v432 = vpack.c.b16 %v408, %v405
        %v433 = vpack.c.b16 %v412, %v409
        %v434 = vpack.c.b16 %v413, %v410
        %v435 = vpack.c.b16 %v414, %v411
        %v436 = vpack.c.b16 %v418, %v415
        %v437 = vpack.c.b16 %v419, %v416
        %v438 = vpack.c.b16 %v420, %v417
        %v439 = vpack.c.b16 %v424, %v421
        %v440 = vpack.c.b16 %v425, %v422
        %v441 = vpack.c.b16 %v426, %v423
        %v442 = vpack.c.b16 %v427, %v427
        %v443 = vpack.c.b16 %v428, %v428
        %v444 = vpack.c.b16 %v429, %v429
        %vm457 = vcmask 588800
        %v459 = vsel %vm457, %v366, 0
        %vm461 = vcmask 1043456
        %v463 = vsel %vm461, %v442, 0
        %v466 = vsel %vm461, %v443, 0
        %v469 = vsel %vm461, %v444, 0
        %471 = vmatprep.subr.bf16.mxu0 %v431
        %472 = vmatpush1.bf16.msra.mxu0 %v430
        %473 = vmatprep.subr.bf16.mxu0 %v434
        %474 = vmatpush1.bf16.msra.mxu0 %v433
        %475 = vmatprep.subr.bf16.mxu0 %v437
        %476 = vmatpush1.bf16.msra.mxu0 %v436
        %477 = vmatprep.subr.bf16.mxu0 %v440
        %478 = vmatpush1.bf16.msra.mxu0 %v439
        %479 = vmatprep.subr.bf16.mxu0 %v466
        %480 = vmatpush1.bf16.msra.mxu0 %v463
        %481 = vmatprep.subr.bf16.mxu0 0
        %482 = vmatpush1.bf16.msra.mxu0 0
        %483 = vmatprep.subr.bf16.mxu0 0
        %484 = vmatpush1.bf16.msra.mxu0 0
        %485 = vmatprep.subr.bf16.mxu0 0
        %486 = vmatpush1.bf16.msra.mxu0 0
        %487 = vmatprep.subr.bf16.mxu0 0
        %488 = vmatpush1.bf16.msra.mxu0 0
        %489 = vmatprep.subr.bf16.mxu0 0
        %490 = vmatpush1.bf16.msra.mxu0 0
        %491 = vmatprep.subr.bf16.mxu0 0
        %492 = vmatpush1.bf16.msra.mxu0 0
        %493 = vmatprep.subr.bf16.mxu0 0
        %494 = vmatpush1.bf16.msra.mxu0 0
        %495 = vmatprep.subr.bf16.mxu0 0
        %496 = vmatpush1.bf16.msra.mxu0 0
        %497 = vmatprep.subr.bf16.mxu0 0
        %498 = vmatpush1.bf16.msra.mxu0 0
        %499 = vmatprep.subr.bf16.mxu0 0
        %500 = vmatpush1.bf16.msra.mxu0 0
        %501 = vmatprep.subr.bf16.mxu0 0
        %502 = vmatpush1.bf16.msra.mxu0 0
        %503 = vmatprep.mubr.bf16.mxu0 0
        %504 = vmatmul.mubr.bf16.gmra.mrb[0].mxu0 %v459
        %v505 = vpop.f32.mrb[0].mxu0
        %v506 = vadd.f32 0.0, %v505
        %v507 = vpop.f32.mrb[0].mxu0
        %v508 = vadd.f32 0.0, %v507
        %v509 = vpop.f32.mrb[0].mxu0
        %v510 = vpop.f32.mrb[0].mxu0
        %511 = vdwg.mxu0
        %512 = vmatprep.subr.bf16.mxu0 0
        %513 = vmatpush1.bf16.msra.mxu0 %v432
        %514 = vmatprep.subr.bf16.mxu0 0
        %515 = vmatpush1.bf16.msra.mxu0 %v435
        %516 = vmatprep.subr.bf16.mxu0 0
        %517 = vmatpush1.bf16.msra.mxu0 %v438
        %518 = vmatprep.subr.bf16.mxu0 0
        %519 = vmatpush1.bf16.msra.mxu0 %v441
        %520 = vmatprep.subr.bf16.mxu0 0
        %521 = vmatpush1.bf16.msra.mxu0 %v469
        %522 = vmatprep.subr.bf16.mxu0 0
        %523 = vmatpush1.bf16.msra.mxu0 0
        %524 = vmatprep.subr.bf16.mxu0 0
        %525 = vmatpush1.bf16.msra.mxu0 0
        %526 = vmatprep.subr.bf16.mxu0 0
        %527 = vmatpush1.bf16.msra.mxu0 0
        %528 = vmatprep.subr.bf16.mxu0 0
        %529 = vmatpush1.bf16.msra.mxu0 0
        %530 = vmatprep.subr.bf16.mxu0 0
        %531 = vmatpush1.bf16.msra.mxu0 0
        %532 = vmatprep.subr.bf16.mxu0 0
        %533 = vmatpush1.bf16.msra.mxu0 0
        %534 = vmatprep.subr.bf16.mxu0 0
        %535 = vmatpush1.bf16.msra.mxu0 0
        %536 = vmatprep.subr.bf16.mxu0 0
        %537 = vmatpush1.bf16.msra.mxu0 0
        %538 = vmatprep.subr.bf16.mxu0 0
        %539 = vmatpush1.bf16.msra.mxu0 0
        %540 = vmatprep.subr.bf16.mxu0 0
        %541 = vmatpush1.bf16.msra.mxu0 0
        %542 = vmatprep.subr.bf16.mxu0 0
        %543 = vmatpush1.bf16.msra.mxu0 0
        %544 = vmatprep.mubr.bf16.mxu0 0
        %545 = vmatmul.mubr.bf16.gmra.mrb[0].mxu0 %v459
        %v546 = vpop.f32.mrb[0].mxu0
        %v547 = vadd.f32 0.0, %v546
        %v548 = vpop.f32.mrb[0].mxu0
        %v549 = vpop.f32.mrb[0].mxu0
        %v550 = vpop.f32.mrb[0].mxu0
        %551 = vdwg.mxu0
        %v552 = vstv %s216
        %v553 = vmul.f32 %v506, %v552
        %v554 = vmul.f32 %v508, %v552
        %v555 = vmul.f32 %v547, %v552
        %v556 = vld [vmem:[%s3] sm:$0xff]
        %558 = vset.pattern.permute.xlu0 0
        %559 = vperm.xlu0 %558, %v556
        %v560 = vpop.permute.xlu0 %559
        %v562 = vadd.f32 %v553, %v560
        %v563 = vadd.f32 %v554, %v560
        %v564 = vadd.f32 %v555, %v560
        %565 = vst [vmem:[%s214] sm:$0xff] %v562
        %566 = vst [vmem:[%s214 + $0x8] sm:$0xff] %v563
        %567 = vst [vmem:[%s214 + $0x10] sm:$0xff] %v564
        %s568 = sand.u32 %s119, 1
        %s569 = scalar_lea.sflag [#allocation6], %s568
        %s570 = sand.u32 %s119, 1
        %s571 = smul.addr %s570, 24
        %s572 = scalar_lea.vmem [#allocation7], %s571
        // Predicated region
        $region41: #{tpu_custom_call.1} parent=35 // pred_check
          %p573 = pneg %p129
        $region42: #{tpu_custom_call.1} parent=35 // pred_check_branch
          %575 = sbr.rel (%p573) target = $region44
        $region43: #{tpu_custom_call.1} parent=35 // pred_region
          %s577 = ssub.s32 384, 384
          %578 = vsyncadd %s569, %s577
          %s579 = smul.addr %s22, 3
          %s580 = smul.addr %s579, 128
          %s581 = scalar_lea.hbm %s4, %s580
          %s583 = sshll.u32 %s572, 4
          %s584 = int_to_ptr.vmem [resolvable:$true] %s583
          %586 = dma.vmem_to_hbm [thread:$0]  %s584, 384, %s581, %s569
        $region44: #{tpu_custom_call.1} parent=35 // pred_fallthru
          _
      $region36: #{tpu_custom_call.1} parent=5 // pred_fallthru
        _
      %p587 = scmp.le.s32.totalorder 2, %s17
      // Predicated region
      $region45: #{tpu_custom_call.1} parent=5 // pred_check
        %p588 = pneg %p587
      $region46: #{tpu_custom_call.1} parent=5 // pred_check_branch
        %590 = sbr.rel (%p588) target = $region48
      $region47: #{tpu_custom_call.1} parent=5 // pred_region
        %s591 = ssub.s32 %s17, 2
        // Predicated region
        $region49: #{tpu_custom_call.1} parent=47 // pred_check
          %p592 = pneg %p135
        $region50: #{tpu_custom_call.1} parent=47 // pred_check_branch
          %594 = sbr.rel (%p592) target = $region52
        $region51: #{tpu_custom_call.1} parent=47 // pred_region
          %s595 = sand.u32 %s120, 1
          %s596 = scalar_lea.sflag [#allocation6], %s595
          %s597 = sand.u32 %s120, 1
          %s598 = smul.addr %s597, 24
          %s599 = scalar_lea.vmem [#allocation7], %s598
          %600 = dma.done %s596, 384
        $region52: #{tpu_custom_call.1} parent=47 // pred_fallthru
          _
      $region48: #{tpu_custom_call.1} parent=5 // pred_fallthru
        _
    $region6: #{tpu_custom_call.1} parent=1 // loop_footer
      %s21 = sadd.s32 1, %s17
    $region7: #{tpu_custom_call.1} parent=1 // loop_footer_branch
      %16 = sbr.rel target = $region3
    $region8: #{tpu_custom_call.1} parent=1 // loop_exit
      _
    %601 = vsyncpa [#allocation5], 1
    %s602 = scalar_lea.sflag [#allocation5], 1
    %603 = vsyncpa %s602, 1
    %604 = vsyncpa [#allocation6], 1
    %s605 = scalar_lea.sflag [#allocation6], 1
    %606 = vsyncpa %s605, 1

</llo_original>
